<compile_context>
chip_gen: v5e
topology: v5e:2x2
jax: 0.10.0
libtpu: 0.0.40
codegen_flags: <defaults>
</compile_context>

<pallas_src>
import jax
import jax.numpy as jnp
from jax.experimental import pallas as pl
from jax.experimental.pallas import tpu as pltpu


def byol_loss_kernel(z_ref, p_ref, o_ref):
    z = z_ref[...].astype(jnp.float32)
    p = p_ref[...].astype(jnp.float32)

    eps = jnp.float32(1e-12)  # matches F.normalize's clamp_min on the norm

    # Algebraic rewrite: no full-tile normalization; just three lane reductions
    # and an exact divide on (tb, 1) scalars (keeps 1e-5 accuracy).
    szz = jnp.sum(z * z, axis=-1, keepdims=True)   # (tb, 1)
    spp = jnp.sum(p * p, axis=-1, keepdims=True)   # (tb, 1)
    szp = jnp.sum(z * p, axis=-1, keepdims=True)   # (tb, 1)

    denom = jnp.maximum(jnp.sqrt(szz), eps) * jnp.maximum(jnp.sqrt(spp), eps)
    dot = szp / denom
    o_ref[...] = (jnp.float32(2.0) - jnp.float32(2.0) * dot).astype(o_ref.dtype)


def _round_up(x, m):
    return -(-x // m) * m


def _vmem_and_cores():
    """Query VMEM capacity and TensorCore count; conservative v7x defaults."""
    vmem_cap = 64 * 1024 * 1024   # v7x per-TC VMEM (smallest of all generations)
    cores = 2                     # assume multi-TC (v7x) if we can't tell
    try:
        info = pltpu.get_tpu_info()
        for name in ("vmem_capacity_bytes", "vmem_bytes", "vmem_size_bytes"):
            v = getattr(info, name, None)
            if isinstance(v, int) and v > 0:
                vmem_cap = v
                break
        for name in ("num_tensorcores", "tensorcores_per_chip", "num_cores",
                     "cores_per_chip", "core_count"):
            c = getattr(info, name, None)
            if isinstance(c, int) and c > 0:
                cores = c
                break
    except Exception:
        pass
    # Scoped VMEM limit: leave headroom under physical capacity.
    # 64 MiB (v7x) -> 48 MiB limit; 128 MiB (v5e/v6e) -> 96 MiB limit.
    vmem_limit = max(32 * 1024 * 1024,
                     min(vmem_cap - 16 * 1024 * 1024, 96 * 1024 * 1024))
    return int(vmem_limit), int(cores)


def _choose_tb(B, D, in_itemsize, vmem_limit_bytes, num_cores):
    """Pick the batch tile from the full per-step VMEM working set.

    Per grid step the resident bytes are approximately
      2 inputs x 2 pipeline buffers x (tb*D*in_itemsize)       (BlockSpec DMA)
    + ~3 live (tb, D) f32 temporaries (upcast z, upcast p, one product)
    and we keep that under ~75% of the scoped VMEM limit.  This automatically
    gives bigger tiles on 128 MiB v5e/v6e and budgets the f32 upcast on v7x.
    """
    # Sublane packing multiple for the input dtype: 8 (32-bit), 16 (bf16), 32 (8-bit).
    mult = 8 * max(1, 4 // in_itemsize)
    per_row_bytes = D * (4 * in_itemsize + 3 * 4)
    budget = (vmem_limit_bytes * 3) // 4
    tb = max(mult, (budget // max(per_row_bytes, 1)) // mult * mult)
    if tb >= B:
        tb = B  # single block covering the (possibly non-multiple-of-8) full batch
    steps = -(-B // tb)
    # Keep both TensorCores of a multi-TC chip (v7x) busy on the "parallel" axis.
    if num_cores >= 2 and steps == 1 and B >= 2 * mult:
        tb = _round_up(-(-B // 2), mult)
    return tb


def byol_loss(z, p, *, tb=None):
    """Pallas TPU implementation of ByolLoss.forward.

    z, p: (B, D) arrays (f32 or bf16 — bf16 halves HBM traffic and is the
    recommended input dtype; the kernel upcasts to f32 internally).
    Returns per-sample loss of shape (B,), float32.
    """
    assert z.shape == p.shape and z.ndim == 2
    B, D = z.shape
    in_itemsize = jnp.dtype(z.dtype).itemsize
    vmem_limit, num_cores = _vmem_and_cores()
    if tb is None:
        tb = _choose_tb(B, D, in_itemsize, vmem_limit, num_cores)
    tb = min(tb, B)
    grid_steps = -(-B // tb)   # cdiv: last block may be partial (masked writeback)

    cost = pl.CostEstimate(
        flops=6 * B * D,                                    # 3 muls + 3 adds / elem
        transcendentals=2 * B,                              # two sqrts per row
        bytes_accessed=2 * B * D * in_itemsize + 4 * B,     # read z,p; write f32 loss
    )

    out = pl.pallas_call(
        byol_loss_kernel,
        out_shape=jax.ShapeDtypeStruct((B, 1), jnp.float32),
        grid_spec=pltpu.PrefetchScalarGridSpec(
            num_scalar_prefetch=0,
            grid=(grid_steps,),
            in_specs=[
                pl.BlockSpec((tb, D), lambda i: (i, 0)),
                pl.BlockSpec((tb, D), lambda i: (i, 0)),
            ],
            # Same index_map as the inputs: garbage rows from the over-read
            # last input block are never stored.
            out_specs=pl.BlockSpec((tb, 1), lambda i: (i, 0)),
        ),
        compiler_params=pltpu.CompilerParams(
            dimension_semantics=("parallel",),
            vmem_limit_bytes=vmem_limit,
        ),
        cost_estimate=cost,
    )(z, p)
    return out[:, 0]


def byol_loss_ref(z, p):
    # Pure-JAX reference mirroring the PyTorch module.
    eps = 1e-12
    z = z.astype(jnp.float32)
    p = p.astype(jnp.float32)
    zn = z / jnp.maximum(jnp.linalg.norm(z, axis=1, keepdims=True), eps)
    pn = p / jnp.maximum(jnp.linalg.norm(p, axis=1, keepdims=True), eps)
    return 2.0 - 2.0 * jnp.sum(zn * pn, axis=-1)


if __name__ == "__main__":
    key = jax.random.PRNGKey(0)
    kz, kp, kz2, kp2 = jax.random.split(key, 4)

    # Small f32 case (strict tolerance).
    B, D = 8, 32
    z = jax.random.normal(kz, (B, D), dtype=jnp.float32)
    p = jax.random.normal(kp, (B, D), dtype=jnp.float32)
    loss = byol_loss(z, p)
    jax.block_until_ready(loss)
    ref = byol_loss_ref(z, p)
    assert loss.shape == (B,)
    assert jnp.allclose(loss, ref, atol=1e-5, rtol=1e-5), (loss, ref)

    # Non-divisible batch with heuristic tiling: exercises the pad-free
    # cdiv grid + masked partial-block writeback.
    B2, D2 = 20, 32
    z2 = jax.random.normal(kz2, (B2, D2), dtype=jnp.float32)
    p2 = jax.random.normal(kp2, (B2, D2), dtype=jnp.float32)
    loss2 = byol_loss(z2, p2)
    jax.block_until_ready(loss2)
    ref2 = byol_loss_ref(z2, p2)
    assert loss2.shape == (B2,)
    assert jnp.allclose(loss2, ref2, atol=1e-5, rtol=1e-5), (loss2, ref2)

    # Same inputs with an explicit tile that forces a multi-step grid with a
    # partial last block (20 rows, tb=8 -> 3 steps, last step 4 valid rows).
    loss3 = byol_loss(z2, p2, tb=8)
    jax.block_until_ready(loss3)
    assert loss3.shape == (B2,)
    assert jnp.allclose(loss3, ref2, atol=1e-5, rtol=1e-5), (loss3, ref2)

    # bf16 inputs (recommended half-HBM-traffic path); loose tolerance for
    # bf16 rounding of the inputs.
    loss_bf16 = byol_loss(z.astype(jnp.bfloat16), p.astype(jnp.bfloat16))
    jax.block_until_ready(loss_bf16)
    assert loss_bf16.shape == (B,)
    assert jnp.allclose(loss_bf16, ref, atol=1e-1), (loss_bf16, ref)

    print("KERNEL_OK")
</pallas_src>

<mosaic_0001>
module attributes {stable_mosaic.version = 11 : i64} {
  func.func @byol_loss_kernel(%arg0: i32, %arg1: memref<8x32xf32, #tpu.memory_space<vmem>>, %arg2: memref<8x32xf32, #tpu.memory_space<vmem>>, %arg3: memref<8x1xf32, #tpu.memory_space<vmem>>) attributes {dimension_semantics = [#tpu.dimension_semantics<parallel>], iteration_bounds = array<i64: 1>, scalar_prefetch = 0 : i64, scratch_operands = 0 : i64, tpu.core_type = #tpu.core_type<tc>, window_params = [{transform_indices = @transform_0, window_bounds = array<i64: 8, 32>}, {transform_indices = @transform_1, window_bounds = array<i64: 8, 32>}, {transform_indices = @transform_2, window_bounds = array<i64: 8, 1>}]} {
    %c0 = arith.constant 0 : index
    %c0_0 = arith.constant 0 : index
    %0 = vector.load %arg1[%c0, %c0_0] : memref<8x32xf32, #tpu.memory_space<vmem>>, vector<8x32xf32>
    %c0_1 = arith.constant 0 : index
    %c0_2 = arith.constant 0 : index
    %1 = vector.load %arg2[%c0_1, %c0_2] : memref<8x32xf32, #tpu.memory_space<vmem>>, vector<8x32xf32>
    %2 = arith.mulf %0, %0 : vector<8x32xf32>
    %cst = arith.constant dense<0.000000e+00> : vector<8xf32>
    %3 = vector.multi_reduction <add>, %2, %cst [1] : vector<8x32xf32> to vector<8xf32>
    %4 = vector.shape_cast %3 : vector<8xf32> to vector<8x1xf32>
    %5 = arith.mulf %1, %1 : vector<8x32xf32>
    %cst_3 = arith.constant dense<0.000000e+00> : vector<8xf32>
    %6 = vector.multi_reduction <add>, %5, %cst_3 [1] : vector<8x32xf32> to vector<8xf32>
    %7 = vector.shape_cast %6 : vector<8xf32> to vector<8x1xf32>
    %8 = arith.mulf %0, %1 : vector<8x32xf32>
    %cst_4 = arith.constant dense<0.000000e+00> : vector<8xf32>
    %9 = vector.multi_reduction <add>, %8, %cst_4 [1] : vector<8x32xf32> to vector<8xf32>
    %10 = vector.shape_cast %9 : vector<8xf32> to vector<8x1xf32>
    %11 = math.sqrt %4 : vector<8x1xf32>
    %cst_5 = arith.constant 9.99999996E-13 : f32
    %12 = vector.broadcast %cst_5 : f32 to vector<8x1xf32>
    %13 = arith.maximumf %11, %12 : vector<8x1xf32>
    %14 = math.sqrt %7 : vector<8x1xf32>
    %cst_6 = arith.constant 9.99999996E-13 : f32
    %15 = vector.broadcast %cst_6 : f32 to vector<8x1xf32>
    %16 = arith.maximumf %14, %15 : vector<8x1xf32>
    %17 = arith.mulf %13, %16 : vector<8x1xf32>
    %18 = arith.divf %10, %17 : vector<8x1xf32>
    %cst_7 = arith.constant 2.000000e+00 : f32
    %19 = vector.broadcast %cst_7 : f32 to vector<8x1xf32>
    %20 = arith.mulf %19, %18 : vector<8x1xf32>
    %cst_8 = arith.constant 2.000000e+00 : f32
    %21 = vector.broadcast %cst_8 : f32 to vector<8x1xf32>
    %22 = arith.subf %21, %20 : vector<8x1xf32>
    %c0_9 = arith.constant 0 : index
    %c0_10 = arith.constant 0 : index
    %23 = vector.load %arg3[%c0_9, %c0_10] : memref<8x1xf32, #tpu.memory_space<vmem>>, vector<8x1xf32>
    tpu.vector_store %arg3[%c0_9, %c0_10], %22 {strides = array<i32>} : memref<8x1xf32, #tpu.memory_space<vmem>>, vector<8x1xf32>,
    return
  }
  func.func @transform_0(%arg0: i32) -> (i32, i32) {
    %c0_i32 = arith.constant 0 : i32
    %c0_i32_0 = arith.constant 0 : i32
    return %arg0, %c0_i32 : i32, i32
  }
  func.func @transform_1(%arg0: i32) -> (i32, i32) {
    %c0_i32 = arith.constant 0 : i32
    %c0_i32_0 = arith.constant 0 : i32
    return %arg0, %c0_i32 : i32, i32
  }
  func.func @transform_2(%arg0: i32) -> (i32, i32) {
    %c0_i32 = arith.constant 0 : i32
    %c0_i32_0 = arith.constant 0 : i32
    return %arg0, %c0_i32 : i32, i32
  }
}

</mosaic_0001>

<llo_original>
// kernel: tpu_custom_call.1
$region0: #{tpu_custom_call.1}
  #allocation0 [shape = 'u32[]', space=smem, size = 0x4, offset = 0x4, fixed_abs, tag = 'smem constant byte address 0x4 - core index']
  #allocation1 [shape = 'u32[72,128]{1,0:T(1,128)}', space=vmem, size = 0x9000, scoped, tag = 'internal scratch']
  %s0 = inlined_call_operand.hbm [shape: f32[8,32], index: 0, kind: input, shape index: {}]
  %s1 = inlined_call_operand.hbm [shape: f32[8,32], index: 1, kind: input, shape index: {}]
  %s2 = inlined_call_operand.vmem [shape: f32[8,1], index: 2, kind: output, shape index: {}]
  %s3 = sld [smem:[#allocation0]]
  $region26: #{tpu_custom_call.1} parent=0
    _
  %s5 = ssub.s32 1, %s3
  %s6 = scalar_select 0, %s5, %s3
  $region1: #{tpu_custom_call.1} parent=0
    #allocation2 [shape = 'u8[4096]{0}', space=vmem, size = 0x1000, scoped, tag = 'input window, operand 0, single buffered']
    #allocation3 [shape = 's32[1]{0}', space=sflag, size = 0x4, scoped, tag = 'scoped memory for tpu_custom_call.1']
    #allocation4 [shape = 'u8[4096]{0}', space=vmem, size = 0x1000, scoped, tag = 'input window, operand 1, single buffered']
    #allocation5 [shape = 's32[1]{0}', space=sflag, size = 0x4, scoped, tag = 'scoped memory for tpu_custom_call.1']
    %7 = vsyncpa [#allocation3], 0
    %8 = vsyncpa [#allocation5], 0
    // Predicated region
    $region2: #{tpu_custom_call.1} parent=1 // pred_check
      _
    $region3: #{tpu_custom_call.1} parent=1 // pred_check_branch
      %10 = sbr.rel (0) target = $region5
    $region4: #{tpu_custom_call.1} parent=1 // pred_region
      %12 = vsyncadd [#allocation3], 0
      %s14 = sshll.u32 %s0, 4
      %s15 = int_to_ptr.hbm [resolvable:$true] %s14
      %s16 = sshll.u32 [#allocation2], 4
      %s17 = int_to_ptr.vmem [resolvable:$true] %s16
      %19 = dma.hbm_to_vmem [thread:$0]  %s15, 128, %s17, [#allocation3]
    $region5: #{tpu_custom_call.1} parent=1 // pred_fallthru
      _
    // Predicated region
    $region6: #{tpu_custom_call.1} parent=1 // pred_check
      _
    $region7: #{tpu_custom_call.1} parent=1 // pred_check_branch
      %21 = sbr.rel (0) target = $region9
    $region8: #{tpu_custom_call.1} parent=1 // pred_region
      %23 = vsyncadd [#allocation5], 0
      %s25 = sshll.u32 %s1, 4
      %s26 = int_to_ptr.hbm [resolvable:$true] %s25
      %s27 = sshll.u32 [#allocation4], 4
      %s28 = int_to_ptr.vmem [resolvable:$true] %s27
      %30 = dma.hbm_to_vmem [thread:$0]  %s26, 128, %s28, [#allocation5]
    $region9: #{tpu_custom_call.1} parent=1 // pred_fallthru
      _
    // Predicated region
    $region10: #{tpu_custom_call.1} parent=1 // pred_check
      _
    $region11: #{tpu_custom_call.1} parent=1 // pred_check_branch
      %32 = sbr.rel (0) target = $region13
    $region12: #{tpu_custom_call.1} parent=1 // pred_region
      %34 = dma.done [#allocation3], 128
    $region13: #{tpu_custom_call.1} parent=1 // pred_fallthru
      _
    // Predicated region
    $region14: #{tpu_custom_call.1} parent=1 // pred_check
      _
    $region15: #{tpu_custom_call.1} parent=1 // pred_check_branch
      %36 = sbr.rel (0) target = $region17
    $region16: #{tpu_custom_call.1} parent=1 // pred_region
      %38 = dma.done [#allocation5], 128
    $region17: #{tpu_custom_call.1} parent=1 // pred_fallthru
      _
    %v39 = vld [vmem:[#allocation2] sm:$0xff]
    %v40 = vld [vmem:[#allocation4] sm:$0xff]
    %v41 = vmul.f32 %v39, %v39
    %vm42 = vcmask 261120
    %v43 = vsel %vm42, %v41, 0.0
    %44 = vadd.xlane.f32.xlu0 %v43
    %v45 = vpop.xlane.xlu0 %44
    %v46 = vmul.f32 %v40, %v40
    %v47 = vsel %vm42, %v46, 0.0
    %48 = vadd.xlane.f32.xlu0 %v47
    %v49 = vpop.xlane.xlu0 %48
    %v50 = vmul.f32 %v39, %v40
    %v51 = vsel %vm42, %v50, 0.0
    %52 = vadd.xlane.f32.xlu0 %v51
    %v53 = vpop.xlane.xlu0 %52
    %v54 = vrsqrt.pop %v45
    %v55 = vmul.f32 %v54, %v45
    %v56 = vmul.f32 %v55, %v54
    %v57 = vmul.f32 0.5, %v56
    %v58 = vsub.f32 1.5, %v57
    %v59 = vmul.f32 %v54, %v58
    %v60 = vmul.f32 %v45, %v59
    %vm61 = vcmp.eq.f32.partialorder %v45, inf
    %v62 = vsel %vm61, %v45, %v60
    %vm63 = vcmp.eq.f32.partialorder %v45, 0.0
    %v64 = vand.u32 %v45, 2147483648
    %v65 = vsel %vm63, %v64, %v62
    %v66 = vmax.f32 %v65, 1e-12
    %v67 = vrsqrt.pop %v49
    %v68 = vmul.f32 %v67, %v49
    %v69 = vmul.f32 %v68, %v67
    %v70 = vmul.f32 0.5, %v69
    %v71 = vsub.f32 1.5, %v70
    %v72 = vmul.f32 %v67, %v71
    %v73 = vmul.f32 %v49, %v72
    %vm74 = vcmp.eq.f32.partialorder %v49, inf
    %v75 = vsel %vm74, %v49, %v73
    %vm76 = vcmp.eq.f32.partialorder %v49, 0.0
    %v77 = vand.u32 %v49, 2147483648
    %v78 = vsel %vm76, %v77, %v75
    %v79 = vmax.f32 %v78, 1e-12
    %v80 = vmul.f32 %v66, %v79
    %v81 = vrcp.pop %v80
    %v82 = vmul.f32 %v80, %v81
    %v83 = vsub.f32 1.0, %v82
    %v84 = vmul.f32 %v81, %v83
    %v85 = vadd.f32 %v81, %v84
    %vm86 = vweird.f32 %v80
    %vm87 = vweird.f32 %v81
    %vm88 = vmor %vm86, %vm87
    %v89 = vsel %vm88, %v81, %v85
    %v90 = vand.u32 2147483647, %v80
    %vm91 = vcmp.eq.f32.partialorder %v90, 8.507059e+37
    %v92 = vand.u32 %v80, 2147483648
    %v93 = vor.u32 1.1754944e-38, %v92
    %v94 = vsel %vm91, %v93, %v89
    %v95 = vmul.f32 %v53, %v94
    %v96 = vmul.f32 %v95, 2.0
    %v97 = vsub.f32 2.0, %v96
    %vm98 = vcmask 7168
    %99 = vst.msk [vmem:[%s2] sm:$0xff] %vm98, %v97
    // Predicated region
    $region18: #{tpu_custom_call.1} parent=1 // pred_check
      _
    $region19: #{tpu_custom_call.1} parent=1 // pred_check_branch
      %101 = sbr.rel (0) target = $region21
    $region20: #{tpu_custom_call.1} parent=1 // pred_region
      _
    $region21: #{tpu_custom_call.1} parent=1 // pred_fallthru
      _
    // Predicated region
    $region22: #{tpu_custom_call.1} parent=1 // pred_check
      _
    $region23: #{tpu_custom_call.1} parent=1 // pred_check_branch
      %103 = sbr.rel (0) target = $region25
    $region24: #{tpu_custom_call.1} parent=1 // pred_region
      _
    $region25: #{tpu_custom_call.1} parent=1 // pred_fallthru
      _
    %104 = vsyncpa [#allocation3], 1
    %105 = vsyncpa [#allocation5], 1

</llo_original>
